<compile_context>
chip_gen: v5e
topology: v5e:2x2
jax: 0.10.0
libtpu: 0.0.40
codegen_flags: <defaults>
</compile_context>

<pallas_src>
import jax
import jax.numpy as jnp
from jax.experimental import pallas as pl
from jax.experimental.pallas import tpu as pltpu

LANE = 128
SUBLANE = 8
MAX_BLOCK_ROWS = 512   # 512*128*4B = 256 KiB/tile; fits scoped VMEM on v5e/v6e/v7x
NUM_CHUNKS = 2         # outer parallel axis; engages both TensorCores on v7x


def _round_up(x, m):
    return ((x + m - 1) // m) * m


def _gan_sums_kernel(x_ref, out_ref):
    """Accumulate vreg-shaped partial sums of x and x^2 into the output block.

    x_ref:   (block_rows, 128) input tile, native dtype.
    out_ref: (1, 2, 8, 128) f32; [0,0] = partial sum(x), [0,1] = partial sum(x^2).
    The output block index depends only on the outer (chunk) axis, so it stays
    resident in VMEM across the inner reduction axis.
    """
    i = pl.program_id(1)

    @pl.when(i == 0)
    def _init():
        out_ref[...] = jnp.zeros_like(out_ref)

    x = x_ref[...].astype(jnp.float32)
    # Fold rows into (8, 128) vreg-shaped partials: reducing over axis 0 is pure
    # elementwise VALU adds (no per-tile XLU tree reduce, no scalar path).
    xr = x.reshape(-1, SUBLANE, LANE)
    out_ref[0, 0, :, :] += jnp.sum(xr, axis=0)
    out_ref[0, 1, :, :] += jnp.sum(xr * xr, axis=0)


def gan_loss(disc_fake_y, disc_real_y):
    # disc_real_y only supplies the target shape (ones_like / zeros_like); MSELoss
    # mean reduction requires it to match disc_fake_y's shape.
    assert disc_fake_y.shape == disc_real_y.shape, "MSELoss targets mirror fake shape"
    n_valid = int(disc_fake_y.size)

    x = disc_fake_y.reshape(-1)            # native dtype; cast to f32 in-kernel
    rows = pl.cdiv(n_valid, LANE)

    if rows <= MAX_BLOCK_ROWS:
        # Small discriminator map: one block, one grid step, no pipeline machinery.
        block_rows = _round_up(rows, 2 * SUBLANE)   # 16-row align (f32 & bf16 packing)
        num_chunks = 1
    else:
        block_rows = MAX_BLOCK_ROWS
        num_chunks = NUM_CHUNKS

    blocks = _round_up(pl.cdiv(rows, block_rows), num_chunks)
    blocks_per_chunk = blocks // num_chunks
    rows_padded = blocks * block_rows

    n_pad = rows_padded * LANE - n_valid
    if n_pad:
        # Zero padding is exact: padded elements add 0 to both sum(x) and sum(x^2),
        # so no correction is needed. Skipped when already block-aligned.
        x = jnp.pad(x, (0, n_pad))
    x2d = x.reshape(rows_padded, LANE)

    itemsize = jnp.dtype(disc_fake_y.dtype).itemsize
    partials = pl.pallas_call(
        _gan_sums_kernel,
        out_shape=jax.ShapeDtypeStruct((num_chunks, 2, SUBLANE, LANE), jnp.float32),
        grid_spec=pltpu.PrefetchScalarGridSpec(
            num_scalar_prefetch=0,
            grid=(num_chunks, blocks_per_chunk),
            in_specs=[
                pl.BlockSpec(
                    (block_rows, LANE),
                    lambda c, i: (c * blocks_per_chunk + i, 0),
                )
            ],
            out_specs=pl.BlockSpec(
                (1, 2, SUBLANE, LANE), lambda c, i: (c, 0, 0, 0)
            ),
        ),
        compiler_params=pltpu.CompilerParams(
            dimension_semantics=("parallel", "arbitrary"),
        ),
        cost_estimate=pl.CostEstimate(
            flops=3 * n_valid,
            transcendentals=0,
            bytes_accessed=n_valid * itemsize + num_chunks * 2 * SUBLANE * LANE * 4,
        ),
    )(x2d)

    s1 = jnp.sum(partials[:, 0])   # sum(x)
    s2 = jnp.sum(partials[:, 1])   # sum(x^2)
    n = jnp.float32(n_valid)
    # mean((x-1)^2) + mean(x^2) = (2*sum(x^2) - 2*sum(x)) / n + 1
    return (2.0 * s2 - 2.0 * s1) / n + 1.0


def gan_loss_ref(disc_fake_y, disc_real_y):
    x = disc_fake_y.astype(jnp.float32)
    return jnp.mean((x - 1.0) ** 2) + jnp.mean(x ** 2)


if __name__ == "__main__":
    key = jax.random.PRNGKey(0)
    k1, k2 = jax.random.split(key)

    # PatchGAN-style discriminator logits: (B, C, H, W) = (2, 4, 16, 16)
    disc_fake_y = jax.random.normal(k1, (2, 4, 16, 16), dtype=jnp.float32)
    disc_real_y = jax.random.normal(k2, (2, 4, 16, 16), dtype=jnp.float32)

    loss = jax.block_until_ready(gan_loss(disc_fake_y, disc_real_y))
    ref = gan_loss_ref(disc_fake_y, disc_real_y)
    assert jnp.allclose(loss, ref, rtol=1e-5, atol=1e-5), (loss, ref)

    # Extra self-checks: an unaligned element count (exercises tail padding) and a
    # larger bf16 map (exercises the multi-block, 2-chunk parallel path).
    for shape, dt in (((2, 3, 15, 17), jnp.float32), ((2, 4, 128, 128), jnp.bfloat16)):
        kf, kr = jax.random.split(jax.random.PRNGKey(1))
        f = jax.random.normal(kf, shape, dtype=dt)
        r = jax.random.normal(kr, shape, dtype=dt)
        got = jax.block_until_ready(gan_loss(f, r))
        want = gan_loss_ref(f, r)
        assert jnp.allclose(got, want, rtol=1e-4, atol=1e-4), (shape, got, want)

    print("KERNEL_OK")
</pallas_src>

<mosaic_0001>
module attributes {stable_mosaic.version = 11 : i64} {
  func.func @_gan_sums_kernel(%arg0: i32, %arg1: i32, %arg2: memref<16x128xf32, #tpu.memory_space<vmem>>, %arg3: memref<1x2x8x128xf32, #tpu.memory_space<vmem>>) attributes {dimension_semantics = [#tpu.dimension_semantics<parallel>, #tpu.dimension_semantics<arbitrary>], iteration_bounds = array<i64: 1, 1>, scalar_prefetch = 0 : i64, scratch_operands = 0 : i64, tpu.core_type = #tpu.core_type<tc>, window_params = [{transform_indices = @transform_0, window_bounds = array<i64: 16, 128>}, {transform_indices = @transform_1, window_bounds = array<i64: 1, 2, 8, 128>}]} {
    %c0_i32 = arith.constant 0 : i32
    %0 = arith.cmpi eq, %arg1, %c0_i32 : i32
    %1 = arith.extui %0 : i1 to i32
    %c0_i32_0 = arith.constant 0 : i32
    %2 = arith.cmpi ne, %1, %c0_i32_0 : i32
    scf.if %2 {
      %cst_18 = arith.constant 0.000000e+00 : f32
      %20 = vector.broadcast %cst_18 : f32 to vector<1x2x8x128xf32>
      %c0_19 = arith.constant 0 : index
      %c0_20 = arith.constant 0 : index
      %c0_21 = arith.constant 0 : index
      %c0_22 = arith.constant 0 : index
      %21 = vector.load %arg3[%c0_19, %c0_20, %c0_21, %c0_22] : memref<1x2x8x128xf32, #tpu.memory_space<vmem>>, vector<1x2x8x128xf32>
      tpu.vector_store %arg3[%c0_19, %c0_20, %c0_21, %c0_22], %20 {strides = array<i32>} : memref<1x2x8x128xf32, #tpu.memory_space<vmem>>, vector<1x2x8x128xf32>,
    } else {
    }
    %c0 = arith.constant 0 : index
    %c0_1 = arith.constant 0 : index
    %3 = vector.load %arg2[%c0, %c0_1] : memref<16x128xf32, #tpu.memory_space<vmem>>, vector<16x128xf32>
    %4 = vector.shape_cast %3 : vector<16x128xf32> to vector<2x8x128xf32>
    %c0_2 = arith.constant 0 : index
    %c0_3 = arith.constant 0 : index
    %c0_4 = arith.constant 0 : index
    %c0_5 = arith.constant 0 : index
    %5 = vector.load %arg3[%c0_2, %c0_3, %c0_4, %c0_5] : memref<1x2x8x128xf32, #tpu.memory_space<vmem>>, vector<1x1x8x128xf32>
    %6 = vector.shape_cast %5 : vector<1x1x8x128xf32> to vector<8x128xf32>
    %cst = arith.constant dense<0.000000e+00> : vector<8x128xf32>
    %7 = vector.multi_reduction <add>, %4, %cst [0] : vector<2x8x128xf32> to vector<8x128xf32>
    %8 = arith.addf %6, %7 : vector<8x128xf32>
    %c0_6 = arith.constant 0 : index
    %c0_7 = arith.constant 0 : index
    %c0_8 = arith.constant 0 : index
    %c0_9 = arith.constant 0 : index
    %9 = vector.load %arg3[%c0_6, %c0_7, %c0_8, %c0_9] : memref<1x2x8x128xf32, #tpu.memory_space<vmem>>, vector<1x1x8x128xf32>
    %10 = vector.shape_cast %9 : vector<1x1x8x128xf32> to vector<8x128xf32>
    %11 = vector.shape_cast %8 : vector<8x128xf32> to vector<1x1x8x128xf32>
    tpu.vector_store %arg3[%c0_6, %c0_7, %c0_8, %c0_9], %11 {strides = array<i32>} : memref<1x2x8x128xf32, #tpu.memory_space<vmem>>, vector<1x1x8x128xf32>,
    %c0_10 = arith.constant 0 : index
    %c1 = arith.constant 1 : index
    %c0_11 = arith.constant 0 : index
    %c0_12 = arith.constant 0 : index
    %12 = vector.load %arg3[%c0_10, %c1, %c0_11, %c0_12] : memref<1x2x8x128xf32, #tpu.memory_space<vmem>>, vector<1x1x8x128xf32>
    %13 = vector.shape_cast %12 : vector<1x1x8x128xf32> to vector<8x128xf32>
    %14 = arith.mulf %4, %4 : vector<2x8x128xf32>
    %cst_13 = arith.constant dense<0.000000e+00> : vector<8x128xf32>
    %15 = vector.multi_reduction <add>, %14, %cst_13 [0] : vector<2x8x128xf32> to vector<8x128xf32>
    %16 = arith.addf %13, %15 : vector<8x128xf32>
    %c0_14 = arith.constant 0 : index
    %c1_15 = arith.constant 1 : index
    %c0_16 = arith.constant 0 : index
    %c0_17 = arith.constant 0 : index
    %17 = vector.load %arg3[%c0_14, %c1_15, %c0_16, %c0_17] : memref<1x2x8x128xf32, #tpu.memory_space<vmem>>, vector<1x1x8x128xf32>
    %18 = vector.shape_cast %17 : vector<1x1x8x128xf32> to vector<8x128xf32>
    %19 = vector.shape_cast %16 : vector<8x128xf32> to vector<1x1x8x128xf32>
    tpu.vector_store %arg3[%c0_14, %c1_15, %c0_16, %c0_17], %19 {strides = array<i32>} : memref<1x2x8x128xf32, #tpu.memory_space<vmem>>, vector<1x1x8x128xf32>,
    return
  }
  func.func @transform_0(%arg0: i32, %arg1: i32) -> (i32, i32) {
    %c1_i32 = arith.constant 1 : i32
    %0 = arith.muli %arg0, %c1_i32 : i32
    %1 = arith.addi %0, %arg1 : i32
    %c0_i32 = arith.constant 0 : i32
    %c0_i32_0 = arith.constant 0 : i32
    return %1, %c0_i32 : i32, i32
  }
  func.func @transform_1(%arg0: i32, %arg1: i32) -> (i32, i32, i32, i32) {
    %c0_i32 = arith.constant 0 : i32
    %c0_i32_0 = arith.constant 0 : i32
    %c0_i32_1 = arith.constant 0 : i32
    %c0_i32_2 = arith.constant 0 : i32
    return %arg0, %c0_i32, %c0_i32_0, %c0_i32_1 : i32, i32, i32, i32
  }
}

</mosaic_0001>

<llo_original>
// kernel: tpu_custom_call.1
$region0: #{tpu_custom_call.1}
  #allocation0 [shape = 'u32[]', space=smem, size = 0x4, offset = 0x4, fixed_abs, tag = 'smem constant byte address 0x4 - core index']
  #allocation1 [shape = 'u32[72,128]{1,0:T(1,128)}', space=vmem, size = 0x9000, scoped, tag = 'internal scratch']
  %s0 = inlined_call_operand.hbm [shape: f32[16,128], index: 0, kind: input, shape index: {}]
  %s1 = inlined_call_operand.hbm [shape: f32[1,2,8,128], index: 1, kind: output, shape index: {}]
  %s2 = sld [smem:[#allocation0]]
  $region22: #{tpu_custom_call.1} parent=0
    _
  %s4 = ssub.s32 1, %s2
  %s5 = scalar_select 0, %s4, %s2
  $region1: #{tpu_custom_call.1} parent=0
    #allocation2 [shape = 'u8[8192]{0}', space=vmem, size = 0x2000, scoped, tag = 'input window, operand 0, single buffered']
    #allocation3 [shape = 's32[1]{0}', space=sflag, size = 0x4, scoped, tag = 'scoped memory for tpu_custom_call.1']
    #allocation4 [shape = 's32[1]{0}', space=sflag, size = 0x4, scoped, tag = 'scoped memory for tpu_custom_call.1']
    #allocation5 [shape = 'u8[8192]{0}', space=vmem, size = 0x2000, scoped, tag = 'output window, operand 0, single buffered']
    %6 = vsyncpa [#allocation3], 0
    %7 = vsyncpa [#allocation4], 0
    // Predicated region
    $region2: #{tpu_custom_call.1} parent=1 // pred_check
      _
    $region3: #{tpu_custom_call.1} parent=1 // pred_check_branch
      %9 = sbr.rel (0) target = $region5
    $region4: #{tpu_custom_call.1} parent=1 // pred_region
      %s10 = sadd.s32 0, 0
      %s11 = smul.u32 2, %s10
      %13 = vsyncadd [#allocation3], 0
      %s14 = smul.addr %s11, 8
      %s15 = scalar_lea.hbm %s0, %s14
      %s16 = sshll.u32 %s15, 4
      %s17 = int_to_ptr.hbm [resolvable:$true] %s16
      %s18 = sshll.u32 [#allocation2], 4
      %s19 = int_to_ptr.vmem [resolvable:$true] %s18
      %24 = dma.hbm_to_vmem [thread:$0]  %s17, 256, %s19, [#allocation3], 128, 128, 8
    $region5: #{tpu_custom_call.1} parent=1 // pred_fallthru
      _
    // Predicated region
    $region6: #{tpu_custom_call.1} parent=1 // pred_check
      _
    $region7: #{tpu_custom_call.1} parent=1 // pred_check_branch
      %26 = sbr.rel (0) target = $region9
    $region8: #{tpu_custom_call.1} parent=1 // pred_region
      %28 = dma.done [#allocation3], 256
    $region9: #{tpu_custom_call.1} parent=1 // pred_fallthru
      _
    %s29 = sadd.s32 0, 0
    %s30 = smul.u32 2, %s29
    %p31 = scmp.eq.s32.totalorder 0, 0
    // Predicated region
    $region10: #{tpu_custom_call.1} parent=1 // pred_check
      %p32 = pneg %p31
    $region11: #{tpu_custom_call.1} parent=1 // pred_check_branch
      %34 = sbr.rel (%p32) target = $region13
    $region12: #{tpu_custom_call.1} parent=1 // pred_region
      %35 = vst [vmem:[#allocation5] sm:$0xff] 0.0
      %36 = vst [vmem:[#allocation5 + $0x8] sm:$0xff] 0.0
    $region13: #{tpu_custom_call.1} parent=1 // pred_fallthru
      _
    %v37 = vld [vmem:[#allocation2] sm:$0xff]
    %v38 = vld [vmem:[#allocation2 + $0x8] sm:$0xff]
    %v39 = vld [vmem:[#allocation5] sm:$0xff]
    %v40 = vadd.f32 %v37, %v38
    %v41 = vadd.f32 %v39, %v40
    %42 = vst [vmem:[#allocation5] sm:$0xff] %v41
    %s43 = scalar_lea.vmem [#allocation5], 8
    %v44 = vld [vmem:[%s43] sm:$0xff]
    %v45 = vmul.f32 %v37, %v37
    %v46 = vmul.f32 %v38, %v38
    %v47 = vadd.f32 %v45, %v46
    %v48 = vadd.f32 %v44, %v47
    %49 = vst [vmem:[%s43] sm:$0xff] %v48
    // Predicated region
    $region14: #{tpu_custom_call.1} parent=1 // pred_check
      _
    $region15: #{tpu_custom_call.1} parent=1 // pred_check_branch
      %51 = sbr.rel (0) target = $region17
    $region16: #{tpu_custom_call.1} parent=1 // pred_region
      %53 = vsyncadd [#allocation4], 0
      %s54 = sshll.u32 [#allocation5], 4
      %s55 = int_to_ptr.vmem [resolvable:$true] %s54
      %s56 = sshll.u32 %s1, 4
      %s57 = int_to_ptr.hbm [resolvable:$true] %s56
      %62 = dma.vmem_to_hbm [thread:$0]  %s55, 256, %s57, [#allocation4], 128, 128, 8
    $region17: #{tpu_custom_call.1} parent=1 // pred_fallthru
      _
    // Predicated region
    $region18: #{tpu_custom_call.1} parent=1 // pred_check
      _
    $region19: #{tpu_custom_call.1} parent=1 // pred_check_branch
      %64 = sbr.rel (0) target = $region21
    $region20: #{tpu_custom_call.1} parent=1 // pred_region
      %66 = dma.done [#allocation4], 256
    $region21: #{tpu_custom_call.1} parent=1 // pred_fallthru
      _
    %67 = vsyncpa [#allocation3], 1
    %68 = vsyncpa [#allocation4], 1

</llo_original>
